<compile_context>
chip_gen: v6e
topology: v6e:2x2x1
jax: 0.10.0
libtpu: 0.0.40
codegen_flags: <defaults>
</compile_context>

<pallas_src>
import functools

import jax
import jax.numpy as jnp
from jax.experimental import pallas as pl
from jax.experimental.pallas import tpu as pltpu


def _round_up(x: int, m: int) -> int:
    return ((x + m - 1) // m) * m


def _corr_acc(xv, f_ref, b_ref, oh: int, ow: int, kh: int, kw: int):
    """Valid cross-correlation of xv [(oh+kh-1, ow+kw-1), f32] with the SMEM filter.

    The accumulator is initialized with the SMEM bias; returns an (oh, ow) f32 value.
    """
    # Hoist the kh*kw SMEM scalar reads out of the tap loop.
    coef = [[f_ref[di, dj] for dj in range(kw)] for di in range(kh)]
    # Initialize with the bias: saves a full-tile add in the epilogue.
    acc = jnp.full((oh, ow), b_ref[0, 0], jnp.float32)
    # Lane shifts hoisted: kw lane-shifted views built once, inner loop only takes
    # sublane slices of each view (cheap relative to per-tap lane rotates).
    for dj in range(kw):
        xj = xv[:, dj:dj + ow]
        for di in range(kh):
            acc = acc + xj[di:di + oh, :] * coef[di][dj]
    return acc


def _conv2d_strip_kernel(x_ref, f_ref, b_ref, o_ref, *, kh: int, kw: int):
    """One grid step computes one row strip of the output.

    x_ref: (Hp, Wp)  VMEM -- whole padded image, resident (fetched from HBM once).
    f_ref: (kh, kw)  SMEM;  b_ref: (1, 1) SMEM.
    o_ref: (th, tw)  VMEM -- lane-dense output strip (tw % 128 == 0).
    """
    th, tw = o_ref.shape
    r0 = pl.multiple_of(pl.program_id(0) * th, 8)               # first output row of strip
    xv = x_ref[pl.ds(r0, th + kh - 1), :].astype(jnp.float32)   # haloed rows, full width
    o_ref[...] = _corr_acc(xv, f_ref, b_ref, th, tw, kh, kw).astype(o_ref.dtype)


def _conv2d_packed_kernel(x_ref, f_ref, b_ref, o_ref, *, kh: int, kw: int):
    """One grid step = one group of lane-packed tiny images.

    x_ref: (1, th+kh-1, tw+kw-1) VMEM;  o_ref: (1, th, tw) VMEM (tw lane-dense).
    """
    th, tw = o_ref.shape[1], o_ref.shape[2]
    xv = x_ref[0].astype(jnp.float32)
    o_ref[0] = _corr_acc(xv, f_ref, b_ref, th, tw, kh, kw).astype(o_ref.dtype)


def _compiler_params(n_parallel_axes: int, vmem_bytes_needed: int):
    cap = 48 << 20  # safe under v7x's 64 MiB physical VMEM; well under v5e/v6e's 128 MiB
    if vmem_bytes_needed > cap:
        raise ValueError(
            f"tile footprint {vmem_bytes_needed} B exceeds the {cap} B VMEM budget; "
            "reduce tile_oh (see TODO(synk) at the top for a streamed-strip variant)")
    return pltpu.CompilerParams(
        dimension_semantics=("parallel",) * n_parallel_axes,
        vmem_limit_bytes=max(32 << 20, vmem_bytes_needed),
    )


def scipy_conv2d(x, filt, bias, *, tile_oh: int = 256):
    """ScipyConv2d.forward for one 2D image: correlate2d(x, filt, 'valid') + bias."""
    h, w = x.shape
    kh, kw = filt.shape
    oh, ow = h - kh + 1, w - kw + 1

    tw = _round_up(ow, 128)                                # lane-dense output width
    th = min(_round_up(oh, 8), _round_up(tile_oh, 8))      # output rows per strip
    n_rows = pl.cdiv(oh, th)
    hp = n_rows * th + kh - 1                              # padded image height
    wp = tw + kw - 1                                       # padded image width

    # Single zero-pad -- the only wrapper-side restaging (no stacked halo strips).
    xp = jnp.pad(x, ((0, hp - h), (0, wp - w))) if (hp, wp) != (h, w) else x
    filt32 = filt.astype(jnp.float32)                      # widen params for SMEM scalar reads
    bias32 = bias.astype(jnp.float32)

    itemsize = jnp.dtype(x.dtype).itemsize
    vmem_needed = (2 * hp * wp * itemsize                  # resident image (2 pipeline bufs)
                   + 2 * th * tw * itemsize                # double-buffered output strip
                   + (kw + 2) * (th + kh - 1) * wp * 4     # f32 views inside the kernel
                   + th * tw * 4                           # f32 accumulator
                   + (2 << 20))                            # headroom

    out = pl.pallas_call(
        functools.partial(_conv2d_strip_kernel, kh=kh, kw=kw),
        out_shape=jax.ShapeDtypeStruct((n_rows * th, tw), x.dtype),
        grid=(n_rows,),
        in_specs=[
            # Whole padded image with a constant index_map -> DMA'd into VMEM exactly once.
            pl.BlockSpec((hp, wp), lambda i: (0, 0)),
            # Filter & bias are tiny; keep them whole in SMEM for cheap scalar reads.
            pl.BlockSpec(memory_space=pltpu.MemorySpace.SMEM),
            pl.BlockSpec(memory_space=pltpu.MemorySpace.SMEM),
        ],
        out_specs=pl.BlockSpec((th, tw), lambda i: (i, 0)),
        compiler_params=_compiler_params(1, vmem_needed),
    )(xp, filt32, bias32)
    return out[:oh, :ow]


def scipy_conv2d_batch(xs, filt, bias):
    """Batched tiny-image variant: xs [B, H, W] -> [B, OH, OW].

    128 // W images are lane-packed side-by-side along the 128-lane axis of a single
    block, so each grid step does G x the useful work of one W-wide image (the old
    one-image-per-step version wasted 114/128 lanes and was dominated by the ~0.35 us
    per-grid-step overhead).
    """
    b, h, w = xs.shape
    kh, kw = filt.shape
    oh, ow = h - kh + 1, w - kw + 1
    if w > 128:
        raise ValueError("lane-packed batch path requires W <= 128; call scipy_conv2d per image")
    g = 128 // w                                   # images per lane-packed group
    bp = _round_up(b, g)
    if bp != b:                                    # pad batch to a whole number of groups
        xs = jnp.concatenate([xs, jnp.zeros((bp - b, h, w), xs.dtype)], axis=0)
    ng = bp // g

    th = _round_up(oh, 8)
    tw = g * w                                     # 128 when w divides 128 -> lane-dense store
    hp = th + kh - 1
    wp = tw + kw - 1

    # Lane-pack g images side-by-side along the lane axis, then zero-pad the halo region.
    packed = xs.reshape(ng, g, h, w).transpose(0, 2, 1, 3).reshape(ng, h, g * w)
    xin = jnp.zeros((ng, hp, wp), xs.dtype).at[:, :h, :g * w].set(packed)

    filt32 = filt.astype(jnp.float32)
    bias32 = bias.astype(jnp.float32)

    itemsize = jnp.dtype(xs.dtype).itemsize
    vmem_needed = (2 * hp * wp * itemsize + 2 * th * tw * itemsize
                   + (kw + 2) * hp * wp * 4 + th * tw * 4 + (2 << 20))

    outp = pl.pallas_call(
        functools.partial(_conv2d_packed_kernel, kh=kh, kw=kw),
        out_shape=jax.ShapeDtypeStruct((ng, th, tw), xs.dtype),
        grid=(ng,),
        in_specs=[
            pl.BlockSpec((1, hp, wp), lambda n: (n, 0, 0)),
            pl.BlockSpec(memory_space=pltpu.MemorySpace.SMEM),
            pl.BlockSpec(memory_space=pltpu.MemorySpace.SMEM),
        ],
        out_specs=pl.BlockSpec((1, th, tw), lambda n: (n, 0, 0)),
        compiler_params=_compiler_params(1, vmem_needed),
    )(xin, filt32, bias32)

    # Unpack: image gi's valid columns inside its group are [gi*w, gi*w + ow); columns past
    # that mix adjacent images' stripes (or the zero pad) and are cropped here.
    out = outp[:, :oh, :].reshape(ng, oh, g, w)[:, :, :, :ow]
    return out.transpose(0, 2, 1, 3).reshape(bp, oh, ow)[:b]


def _reference(x, filt, bias):
    """Pure-JAX reference (same semantics as scipy correlate2d 'valid' + bias)."""
    h, w = x.shape
    kh, kw = filt.shape
    oh, ow = h - kh + 1, w - kw + 1
    acc = jnp.zeros((oh, ow), jnp.float32)
    for di in range(kh):
        for dj in range(kw):
            acc = acc + x[di:di + oh, dj:dj + ow].astype(jnp.float32) * filt[di, dj]
    return acc + bias[0, 0]


if __name__ == "__main__":
    key = jax.random.PRNGKey(0)
    k_x, k_f, k_b, k_xb, k_xl = jax.random.split(key, 5)

    # ScipyConv2d(filter_width=3, filter_height=3): filter (3, 3), bias (1, 1).
    KH, KW = 3, 3
    filt = jax.random.normal(k_f, (KH, KW), dtype=jnp.float32)
    bias = jax.random.normal(k_b, (1, 1), dtype=jnp.float32)

    # 1) Single small image (the module's literal use case).
    H, W = 16, 16
    x = jax.random.normal(k_x, (H, W), dtype=jnp.float32)
    out = jax.block_until_ready(scipy_conv2d(x, filt, bias))
    assert out.shape == (H - KH + 1, W - KW + 1), out.shape
    assert jnp.allclose(out, _reference(x, filt, bias), atol=1e-5, rtol=1e-5), "single-image mismatch"

    # 2) Larger image with a small strip height: exercises the multi-strip parallel grid
    #    with the in-kernel haloed row slice of the VMEM-resident image (no restaging).
    HL, WL = 40, 40
    xl = jax.random.normal(k_xl, (HL, WL), dtype=jnp.float32)
    out_l = jax.block_until_ready(scipy_conv2d(xl, filt, bias, tile_oh=16))
    assert out_l.shape == (HL - KH + 1, WL - KW + 1), out_l.shape
    assert jnp.allclose(out_l, _reference(xl, filt, bias), atol=1e-5, rtol=1e-5), "strip-path mismatch"

    # 3) Batched tiny images, lane-packed 8 per block (16 lanes each -> full 128-lane vreg).
    B = 16
    xb = jax.random.normal(k_xb, (B, H, W), dtype=jnp.float32)
    out_b = jax.block_until_ready(scipy_conv2d_batch(xb, filt, bias))
    assert out_b.shape == (B, H - KH + 1, W - KW + 1), out_b.shape
    for i in range(B):
        assert jnp.allclose(out_b[i], _reference(xb[i], filt, bias), atol=1e-5, rtol=1e-5), \
            f"batched mismatch at item {i}"

    print("KERNEL_OK")
</pallas_src>

<mosaic_0001>
module attributes {stable_mosaic.version = 11 : i64} {
  func.func @_conv2d_strip_kernel(%arg0: i32, %arg1: memref<18x130xf32, #tpu.memory_space<vmem>>, %arg2: memref<3x3xf32, #tpu.memory_space<smem>>, %arg3: memref<1x1xf32, #tpu.memory_space<smem>>, %arg4: memref<16x128xf32, #tpu.memory_space<vmem>>) attributes {dimension_semantics = [#tpu.dimension_semantics<parallel>], iteration_bounds = array<i64: 1>, scalar_prefetch = 0 : i64, scratch_operands = 0 : i64, tpu.core_type = #tpu.core_type<tc>, window_params = [{pipeline_mode = #tpu.pipeline_mode<synchronous>, transform_indices = @transform_0, window_bounds = array<i64: 18, 130>}, {transform_indices = @transform_1, window_bounds = array<i64: 3, 3>}, {transform_indices = @transform_2, window_bounds = array<i64: 1, 1>}, {transform_indices = @transform_3, window_bounds = array<i64: 16, 128>}]} {
    %c16_i32 = arith.constant 16 : i32
    %0 = arith.muli %arg0, %c16_i32 : i32
    %1 = tpu.assume_multiple %0, 8 : i32
    %2 = arith.index_cast %1 : i32 to index
    %c0 = arith.constant 0 : index
    %3 = vector.load %arg1[%2, %c0] : memref<18x130xf32, #tpu.memory_space<vmem>>, vector<18x130xf32>
    %c0_0 = arith.constant 0 : index
    %c0_1 = arith.constant 0 : index
    %4 = memref.load %arg2[%c0_0, %c0_1] : memref<3x3xf32, #tpu.memory_space<smem>>
    %c0_2 = arith.constant 0 : index
    %c1 = arith.constant 1 : index
    %5 = memref.load %arg2[%c0_2, %c1] : memref<3x3xf32, #tpu.memory_space<smem>>
    %c0_3 = arith.constant 0 : index
    %c2 = arith.constant 2 : index
    %6 = memref.load %arg2[%c0_3, %c2] : memref<3x3xf32, #tpu.memory_space<smem>>
    %c1_4 = arith.constant 1 : index
    %c0_5 = arith.constant 0 : index
    %7 = memref.load %arg2[%c1_4, %c0_5] : memref<3x3xf32, #tpu.memory_space<smem>>
    %c1_6 = arith.constant 1 : index
    %c1_7 = arith.constant 1 : index
    %8 = memref.load %arg2[%c1_6, %c1_7] : memref<3x3xf32, #tpu.memory_space<smem>>
    %c1_8 = arith.constant 1 : index
    %c2_9 = arith.constant 2 : index
    %9 = memref.load %arg2[%c1_8, %c2_9] : memref<3x3xf32, #tpu.memory_space<smem>>
    %c2_10 = arith.constant 2 : index
    %c0_11 = arith.constant 0 : index
    %10 = memref.load %arg2[%c2_10, %c0_11] : memref<3x3xf32, #tpu.memory_space<smem>>
    %c2_12 = arith.constant 2 : index
    %c1_13 = arith.constant 1 : index
    %11 = memref.load %arg2[%c2_12, %c1_13] : memref<3x3xf32, #tpu.memory_space<smem>>
    %c2_14 = arith.constant 2 : index
    %c2_15 = arith.constant 2 : index
    %12 = memref.load %arg2[%c2_14, %c2_15] : memref<3x3xf32, #tpu.memory_space<smem>>
    %c0_16 = arith.constant 0 : index
    %c0_17 = arith.constant 0 : index
    %13 = memref.load %arg3[%c0_16, %c0_17] : memref<1x1xf32, #tpu.memory_space<smem>>
    %14 = vector.broadcast %13 : f32 to vector<16x128xf32>
    %15 = vector.extract_strided_slice %3 {offsets = [0, 0], sizes = [18, 128], strides = [1, 1]} : vector<18x130xf32> to vector<18x128xf32>
    %16 = vector.extract_strided_slice %15 {offsets = [0, 0], sizes = [16, 128], strides = [1, 1]} : vector<18x128xf32> to vector<16x128xf32>
    %17 = vector.broadcast %4 : f32 to vector<16x128xf32>
    %18 = arith.mulf %16, %17 : vector<16x128xf32>
    %19 = arith.addf %14, %18 : vector<16x128xf32>
    %20 = vector.extract_strided_slice %15 {offsets = [1, 0], sizes = [16, 128], strides = [1, 1]} : vector<18x128xf32> to vector<16x128xf32>
    %21 = vector.broadcast %7 : f32 to vector<16x128xf32>
    %22 = arith.mulf %20, %21 : vector<16x128xf32>
    %23 = arith.addf %19, %22 : vector<16x128xf32>
    %24 = vector.extract_strided_slice %15 {offsets = [2, 0], sizes = [16, 128], strides = [1, 1]} : vector<18x128xf32> to vector<16x128xf32>
    %25 = vector.broadcast %10 : f32 to vector<16x128xf32>
    %26 = arith.mulf %24, %25 : vector<16x128xf32>
    %27 = arith.addf %23, %26 : vector<16x128xf32>
    %28 = vector.extract_strided_slice %3 {offsets = [0, 1], sizes = [18, 128], strides = [1, 1]} : vector<18x130xf32> to vector<18x128xf32>
    %29 = vector.extract_strided_slice %28 {offsets = [0, 0], sizes = [16, 128], strides = [1, 1]} : vector<18x128xf32> to vector<16x128xf32>
    %30 = vector.broadcast %5 : f32 to vector<16x128xf32>
    %31 = arith.mulf %29, %30 : vector<16x128xf32>
    %32 = arith.addf %27, %31 : vector<16x128xf32>
    %33 = vector.extract_strided_slice %28 {offsets = [1, 0], sizes = [16, 128], strides = [1, 1]} : vector<18x128xf32> to vector<16x128xf32>
    %34 = vector.broadcast %8 : f32 to vector<16x128xf32>
    %35 = arith.mulf %33, %34 : vector<16x128xf32>
    %36 = arith.addf %32, %35 : vector<16x128xf32>
    %37 = vector.extract_strided_slice %28 {offsets = [2, 0], sizes = [16, 128], strides = [1, 1]} : vector<18x128xf32> to vector<16x128xf32>
    %38 = vector.broadcast %11 : f32 to vector<16x128xf32>
    %39 = arith.mulf %37, %38 : vector<16x128xf32>
    %40 = arith.addf %36, %39 : vector<16x128xf32>
    %41 = vector.extract_strided_slice %3 {offsets = [0, 2], sizes = [18, 128], strides = [1, 1]} : vector<18x130xf32> to vector<18x128xf32>
    %42 = vector.extract_strided_slice %41 {offsets = [0, 0], sizes = [16, 128], strides = [1, 1]} : vector<18x128xf32> to vector<16x128xf32>
    %43 = vector.broadcast %6 : f32 to vector<16x128xf32>
    %44 = arith.mulf %42, %43 : vector<16x128xf32>
    %45 = arith.addf %40, %44 : vector<16x128xf32>
    %46 = vector.extract_strided_slice %41 {offsets = [1, 0], sizes = [16, 128], strides = [1, 1]} : vector<18x128xf32> to vector<16x128xf32>
    %47 = vector.broadcast %9 : f32 to vector<16x128xf32>
    %48 = arith.mulf %46, %47 : vector<16x128xf32>
    %49 = arith.addf %45, %48 : vector<16x128xf32>
    %50 = vector.extract_strided_slice %41 {offsets = [2, 0], sizes = [16, 128], strides = [1, 1]} : vector<18x128xf32> to vector<16x128xf32>
    %51 = vector.broadcast %12 : f32 to vector<16x128xf32>
    %52 = arith.mulf %50, %51 : vector<16x128xf32>
    %53 = arith.addf %49, %52 : vector<16x128xf32>
    %c0_18 = arith.constant 0 : index
    %c0_19 = arith.constant 0 : index
    %54 = vector.load %arg4[%c0_18, %c0_19] : memref<16x128xf32, #tpu.memory_space<vmem>>, vector<16x128xf32>
    tpu.vector_store %arg4[%c0_18, %c0_19], %53 {strides = array<i32>} : memref<16x128xf32, #tpu.memory_space<vmem>>, vector<16x128xf32>,
    return
  }
  func.func @transform_0(%arg0: i32) -> (i32, i32) {
    %c0_i32 = arith.constant 0 : i32
    %c0_i32_0 = arith.constant 0 : i32
    %c0_i32_1 = arith.constant 0 : i32
    return %c0_i32, %c0_i32_0 : i32, i32
  }
  func.func @transform_1(%arg0: i32) -> (i32, i32) {
    %c0_i32 = arith.constant 0 : i32
    %c0_i32_0 = arith.constant 0 : i32
    %c0_i32_1 = arith.constant 0 : i32
    return %c0_i32, %c0_i32_0 : i32, i32
  }
  func.func @transform_2(%arg0: i32) -> (i32, i32) {
    %c0_i32 = arith.constant 0 : i32
    %c0_i32_0 = arith.constant 0 : i32
    %c0_i32_1 = arith.constant 0 : i32
    return %c0_i32, %c0_i32_0 : i32, i32
  }
  func.func @transform_3(%arg0: i32) -> (i32, i32) {
    %c0_i32 = arith.constant 0 : i32
    %c0_i32_0 = arith.constant 0 : i32
    return %arg0, %c0_i32 : i32, i32
  }
}

</mosaic_0001>

<llo_original>
// kernel: tpu_custom_call.1
$region0: #{tpu_custom_call.1}
  #allocation0 [shape = 'u32[]', space=smem, size = 0x4, offset = 0x4, fixed_abs, tag = 'smem constant byte address 0x4 - core index']
  #allocation1 [shape = 'u32[144,128]{1,0:T(1,128)}', space=vmem, size = 0x12000, scoped, tag = 'internal scratch']
  #allocation2 [shape = 'f32[1,1]{1,0:T(1,128)S(6)}', space=smem, size = 0x200, scoped, tag = 'scoped memory for tpu_custom_call.1']
  %s0 = inlined_call_operand.hbm [shape: f32[18,130], index: 0, kind: input, shape index: {}]
  %s1 = inlined_call_operand.hbm [shape: f32[3,3], index: 1, kind: input, shape index: {}]
  %s2 = inlined_call_operand.<no memory space> [shape: f32[1,1], index: 2, kind: input, shape index: {}]
  %s3 = inlined_call_operand.hbm [shape: f32[16,128], index: 3, kind: output, shape index: {}]
  %s4 = sld [smem:[#allocation0]]
  $region30: #{tpu_custom_call.1} parent=0
    _
  %s6 = ssub.s32 1, %s4
  %s7 = scalar_select 0, %s6, %s4
  %8 = sst [smem:[#allocation2]] %s2
  $region1: #{tpu_custom_call.1} parent=0
    #allocation3 [shape = 'u8[24576]{0}', space=vmem, size = 0x6000, scoped, tag = 'input window, operand 0, single buffered']
    #allocation4 [shape = 's32[1]{0}', space=sflag, size = 0x4, scoped, tag = 'scoped memory for tpu_custom_call.1']
    #allocation5 [shape = 's32[1]{0}', space=sflag, size = 0x4, scoped, tag = 'scoped memory for tpu_custom_call.1']
    #allocation6 [shape = 's32[1]{0}', space=sflag, size = 0x4, scoped, tag = 'scoped memory for tpu_custom_call.1']
    #allocation7 [shape = 'u8[2048]{0}', space=smem, size = 0x800, scoped, tag = 'input window, operand 1, single buffered']
    #allocation8 [shape = 'u8[8192]{0}', space=vmem, size = 0x2000, scoped, tag = 'output window, operand 0, single buffered']
    %9 = vsyncpa [#allocation4], 0
    %10 = vsyncpa [#allocation6], 0
    %11 = vsyncpa [#allocation5], 0
    // Predicated region
    $region2: #{tpu_custom_call.1} parent=1 // pred_check
      _
    $region3: #{tpu_custom_call.1} parent=1 // pred_check_branch
      %13 = sbr.rel (0) target = $region5
    $region4: #{tpu_custom_call.1} parent=1 // pred_region
      %s15 = ssub.s32 768, 768
      %16 = vsyncadd [#allocation4], %s15
      %s17 = sshll.u32 [#allocation3], 4
      %s18 = int_to_ptr.vmem [resolvable:$true] %s17
      %23 = dma.hbm_to_vmem [thread:$0]  %s0, 768, %s18, [#allocation4], 256, 256, 16
    $region5: #{tpu_custom_call.1} parent=1 // pred_fallthru
      _
    // Predicated region
    $region6: #{tpu_custom_call.1} parent=1 // pred_check
      _
    $region7: #{tpu_custom_call.1} parent=1 // pred_check_branch
      %25 = sbr.rel (0) target = $region9
    $region8: #{tpu_custom_call.1} parent=1 // pred_region
      %s27 = ssub.s32 64, 64
      %28 = vsyncadd [#allocation6], %s27
      %31 = dma.hbm_to_smem %s1, 64, [#allocation7], [#allocation6]
    $region9: #{tpu_custom_call.1} parent=1 // pred_fallthru
      _
    // Predicated region
    $region10: #{tpu_custom_call.1} parent=1 // pred_check
      _
    $region11: #{tpu_custom_call.1} parent=1 // pred_check_branch
      %33 = sbr.rel (0) target = $region13
    $region12: #{tpu_custom_call.1} parent=1 // pred_region
      _
    $region13: #{tpu_custom_call.1} parent=1 // pred_fallthru
      _
    // Predicated region
    $region14: #{tpu_custom_call.1} parent=1 // pred_check
      _
    $region15: #{tpu_custom_call.1} parent=1 // pred_check_branch
      %35 = sbr.rel (0) target = $region17
    $region16: #{tpu_custom_call.1} parent=1 // pred_region
      %36 = dma.done [#allocation4], 768
    $region17: #{tpu_custom_call.1} parent=1 // pred_fallthru
      _
    // Predicated region
    $region18: #{tpu_custom_call.1} parent=1 // pred_check
      _
    $region19: #{tpu_custom_call.1} parent=1 // pred_check_branch
      %38 = sbr.rel (0) target = $region21
    $region20: #{tpu_custom_call.1} parent=1 // pred_region
      %39 = dma.done [#allocation6], 64
    $region21: #{tpu_custom_call.1} parent=1 // pred_fallthru
      _
    %40 = sfence
    %s41 = smul.u32 0, 16
    %s42 = sshra.s32 %s41, 3
    %s43 = sand.u32 %s41, 7
    %s44 = smul.u32 %s42, 2
    %s45 = smul.addr %s44, 8
    %s46 = scalar_lea.vmem [#allocation3], %s45
    %v47 = vld [vmem:[%s46] sm:$0xff]
    %v48 = vld [vmem:[%s46 + $0x8] sm:$0xff]
    %v49 = vld [vmem:[%s46 + $0x10] sm:$0xff]
    %v50 = vld [vmem:[%s46 + $0x18] sm:$0xff]
    %v51 = vld [vmem:[%s46 + $0x20] sm:$0x3]
    %v52 = vld [vmem:[%s46 + $0x28] sm:$0x3]
    %s53 = sld [smem:[#allocation7]]
    %s54 = sld [smem:[#allocation7 + $0x1]]
    %s55 = sld [smem:[#allocation7 + $0x2]]
    %s56 = sld [smem:[#allocation7 + $0x80]]
    %s57 = sld [smem:[#allocation7 + $0x81]]
    %s58 = sld [smem:[#allocation7 + $0x82]]
    %s59 = sld [smem:[#allocation7 + $0x100]]
    %s60 = sld [smem:[#allocation7 + $0x101]]
    %s61 = sld [smem:[#allocation7 + $0x102]]
    %s62 = sld [smem:[#allocation2]]
    %v63 = vstv %s62
    %v64 = vstv %s53
    %v65 = vmul.f32 %v47, %v64
    %v66 = vmul.f32 %v49, %v64
    %v67 = vadd.f32 %v63, %v65
    %v68 = vadd.f32 %v63, %v66
    %v69 = vstv %s56
    %v70 = vmul.f32 %v47, %v69
    %v71 = vmul.f32 %v49, %v69
    %v72 = vmul.f32 %v51, %v69
    %vm76 = vcmask 1046528
    %v77 = vrot.slane %v70, 1
    %v78 = vrot.slane %v71, 1
    %v79 = vsel %vm76, %v77, %v78
    %v80 = vrot.slane %v72, 1
    %v81 = vsel %vm76, %v78, %v80
    %v84 = vadd.f32 %v67, %v79
    %v85 = vadd.f32 %v68, %v81
    %v86 = vstv %s59
    %v87 = vmul.f32 %v47, %v86
    %v88 = vmul.f32 %v49, %v86
    %v89 = vmul.f32 %v51, %v86
    %vm93 = vcmask 1045504
    %v94 = vrot.slane %v87, 2
    %v95 = vrot.slane %v88, 2
    %v96 = vsel %vm93, %v94, %v95
    %v97 = vrot.slane %v89, 2
    %v98 = vsel %vm93, %v95, %v97
    %v101 = vadd.f32 %v84, %v96
    %v102 = vadd.f32 %v85, %v98
    %v103 = vstv %s54
    %v104 = vmul.f32 %v47, %v103
    %v105 = vmul.f32 %v48, %v103
    %v106 = vmul.f32 %v49, %v103
    %v107 = vmul.f32 %v50, %v103
    %112 = vrot.lane.b32.xlu0 %v104, 127
    %v113 = vpop.permute.xlu0 %112
    %114 = vrot.lane.b32.xlu0 %v105, 127
    %v115 = vpop.permute.xlu0 %114
    %116 = vrot.lane.b32.xlu0 %v106, 127
    %v117 = vpop.permute.xlu0 %116
    %118 = vrot.lane.b32.xlu0 %v107, 127
    %v119 = vpop.permute.xlu0 %118
    %vm120 = vcmask 1039360
    %v121 = vsel %vm120, %v113, %v115
    %v122 = vsel %vm120, %v117, %v119
    %v125 = vadd.f32 %v101, %v121
    %v126 = vadd.f32 %v102, %v122
    %v127 = vstv %s57
    %v128 = vmul.f32 %v47, %v127
    %v129 = vmul.f32 %v48, %v127
    %v130 = vmul.f32 %v49, %v127
    %v131 = vmul.f32 %v50, %v127
    %v132 = vmul.f32 %v51, %v127
    %v133 = vmul.f32 %v52, %v127
    %v140 = vrot.slane %v128, 1
    %v141 = vrot.slane %v130, 1
    %v142 = vsel %vm76, %v140, %v141
    %v143 = vrot.slane %v129, 1
    %v144 = vrot.slane %v131, 1
    %v145 = vsel %vm76, %v143, %v144
    %v146 = vrot.slane %v132, 1
    %v147 = vsel %vm76, %v141, %v146
    %v148 = vrot.slane %v133, 1
    %v149 = vsel %vm76, %v144, %v148
    %150 = vrot.lane.b32.xlu0 %v142, 127
    %v151 = vpop.permute.xlu0 %150
    %152 = vrot.lane.b32.xlu0 %v145, 127
    %v153 = vpop.permute.xlu0 %152
    %154 = vrot.lane.b32.xlu0 %v147, 127
    %v155 = vpop.permute.xlu0 %154
    %156 = vrot.lane.b32.xlu0 %v149, 127
    %v157 = vpop.permute.xlu0 %156
    %v158 = vsel %vm120, %v151, %v153
    %v159 = vsel %vm120, %v155, %v157
    %v162 = vadd.f32 %v125, %v158
    %v163 = vadd.f32 %v126, %v159
    %v164 = vstv %s60
    %v165 = vmul.f32 %v47, %v164
    %v166 = vmul.f32 %v48, %v164
    %v167 = vmul.f32 %v49, %v164
    %v168 = vmul.f32 %v50, %v164
    %v169 = vmul.f32 %v51, %v164
    %v170 = vmul.f32 %v52, %v164
    %v177 = vrot.slane %v165, 2
    %v178 = vrot.slane %v167, 2
    %v179 = vsel %vm93, %v177, %v178
    %v180 = vrot.slane %v166, 2
    %v181 = vrot.slane %v168, 2
    %v182 = vsel %vm93, %v180, %v181
    %v183 = vrot.slane %v169, 2
    %v184 = vsel %vm93, %v178, %v183
    %v185 = vrot.slane %v170, 2
    %v186 = vsel %vm93, %v181, %v185
    %187 = vrot.lane.b32.xlu0 %v179, 127
    %v188 = vpop.permute.xlu0 %187
    %189 = vrot.lane.b32.xlu0 %v182, 127
    %v190 = vpop.permute.xlu0 %189
    %191 = vrot.lane.b32.xlu0 %v184, 127
    %v192 = vpop.permute.xlu0 %191
    %193 = vrot.lane.b32.xlu0 %v186, 127
    %v194 = vpop.permute.xlu0 %193
    %v195 = vsel %vm120, %v188, %v190
    %v196 = vsel %vm120, %v192, %v194
    %v199 = vadd.f32 %v162, %v195
    %v200 = vadd.f32 %v163, %v196
    %v201 = vstv %s55
    %v202 = vmul.f32 %v47, %v201
    %v203 = vmul.f32 %v48, %v201
    %v204 = vmul.f32 %v49, %v201
    %v205 = vmul.f32 %v50, %v201
    %210 = vrot.lane.b32.xlu0 %v202, 126
    %v211 = vpop.permute.xlu0 %210
    %212 = vrot.lane.b32.xlu0 %v203, 126
    %v213 = vpop.permute.xlu0 %212
    %214 = vrot.lane.b32.xlu0 %v204, 126
    %v215 = vpop.permute.xlu0 %214
    %216 = vrot.lane.b32.xlu0 %v205, 126
    %v217 = vpop.permute.xlu0 %216
    %vm218 = vcmask 1031168
    %v219 = vsel %vm218, %v211, %v213
    %v220 = vsel %vm218, %v215, %v217
    %v223 = vadd.f32 %v199, %v219
    %v224 = vadd.f32 %v200, %v220
    %v225 = vstv %s58
    %v226 = vmul.f32 %v47, %v225
    %v227 = vmul.f32 %v48, %v225
    %v228 = vmul.f32 %v49, %v225
    %v229 = vmul.f32 %v50, %v225
    %v230 = vmul.f32 %v51, %v225
    %v231 = vmul.f32 %v52, %v225
    %v238 = vrot.slane %v226, 1
    %v239 = vrot.slane %v228, 1
    %v240 = vsel %vm76, %v238, %v239
    %v241 = vrot.slane %v227, 1
    %v242 = vrot.slane %v229, 1
    %v243 = vsel %vm76, %v241, %v242
    %v244 = vrot.slane %v230, 1
    %v245 = vsel %vm76, %v239, %v244
    %v246 = vrot.slane %v231, 1
    %v247 = vsel %vm76, %v242, %v246
    %248 = vrot.lane.b32.xlu0 %v240, 126
    %v249 = vpop.permute.xlu0 %248
    %250 = vrot.lane.b32.xlu0 %v243, 126
    %v251 = vpop.permute.xlu0 %250
    %252 = vrot.lane.b32.xlu0 %v245, 126
    %v253 = vpop.permute.xlu0 %252
    %254 = vrot.lane.b32.xlu0 %v247, 126
    %v255 = vpop.permute.xlu0 %254
    %v256 = vsel %vm218, %v249, %v251
    %v257 = vsel %vm218, %v253, %v255
    %v260 = vadd.f32 %v223, %v256
    %v261 = vadd.f32 %v224, %v257
    %v262 = vstv %s61
    %v263 = vmul.f32 %v47, %v262
    %v264 = vmul.f32 %v48, %v262
    %v265 = vmul.f32 %v49, %v262
    %v266 = vmul.f32 %v50, %v262
    %v267 = vmul.f32 %v51, %v262
    %v268 = vmul.f32 %v52, %v262
    %v275 = vrot.slane %v263, 2
    %v276 = vrot.slane %v265, 2
    %v277 = vsel %vm93, %v275, %v276
    %v278 = vrot.slane %v264, 2
    %v279 = vrot.slane %v266, 2
    %v280 = vsel %vm93, %v278, %v279
    %v281 = vrot.slane %v267, 2
    %v282 = vsel %vm93, %v276, %v281
    %v283 = vrot.slane %v268, 2
    %v284 = vsel %vm93, %v279, %v283
    %285 = vrot.lane.b32.xlu0 %v277, 126
    %v286 = vpop.permute.xlu0 %285
    %287 = vrot.lane.b32.xlu0 %v280, 126
    %v288 = vpop.permute.xlu0 %287
    %289 = vrot.lane.b32.xlu0 %v282, 126
    %v290 = vpop.permute.xlu0 %289
    %291 = vrot.lane.b32.xlu0 %v284, 126
    %v292 = vpop.permute.xlu0 %291
    %v293 = vsel %vm218, %v286, %v288
    %v294 = vsel %vm218, %v290, %v292
    %v297 = vadd.f32 %v260, %v293
    %v298 = vadd.f32 %v261, %v294
    %299 = vst [vmem:[#allocation8] sm:$0xff] %v297
    %300 = vst [vmem:[#allocation8 + $0x8] sm:$0xff] %v298
    // Predicated region
    $region22: #{tpu_custom_call.1} parent=1 // pred_check
      _
    $region23: #{tpu_custom_call.1} parent=1 // pred_check_branch
      %302 = sbr.rel (0) target = $region25
    $region24: #{tpu_custom_call.1} parent=1 // pred_region
      %s304 = ssub.s32 256, 256
      %305 = vsyncadd [#allocation5], %s304
      %s306 = sshll.u32 [#allocation8], 4
      %s307 = int_to_ptr.vmem [resolvable:$true] %s306
      %312 = dma.vmem_to_hbm [thread:$0]  %s307, 256, %s3, [#allocation5], 128, 128, 8
    $region25: #{tpu_custom_call.1} parent=1 // pred_fallthru
      _
    // Predicated region
    $region26: #{tpu_custom_call.1} parent=1 // pred_check
      _
    $region27: #{tpu_custom_call.1} parent=1 // pred_check_branch
      %314 = sbr.rel (0) target = $region29
    $region28: #{tpu_custom_call.1} parent=1 // pred_region
      %315 = dma.done [#allocation5], 256
    $region29: #{tpu_custom_call.1} parent=1 // pred_fallthru
      _
    %316 = vsyncpa [#allocation4], 1
    %317 = vsyncpa [#allocation5], 1
    %318 = vsyncpa [#allocation6], 1

</llo_original>
